<compile_context>
chip_gen: v6e
topology: v6e:2x2x1
jax: 0.10.0
libtpu: 0.0.40
codegen_flags: <defaults>
</compile_context>

<pallas_src>
import jax
import jax.numpy as jnp
from jax.experimental import pallas as pl
from jax.experimental.pallas import tpu as pltpu

_GELU_C = 0.7978845608028654  # sqrt(2/pi)


def _gelu_tanh(h):
    # Factored tanh-GELU (matches nn.GELU(approximate='tanh')); h2 hoisted so
    # the VALU sees the minimal op count; tanh lowers to the EUP slot.
    h2 = h * h
    return 0.5 * h * (1.0 + jnp.tanh(_GELU_C * h * (1.0 + 0.044715 * h2)))


def mlp_kernel_resident(x_ref, wfc_ref, bfc_ref, wproj_ref, bproj_ref, o_ref):
    # Weights are fully VMEM-resident (constant block index across the grid):
    # x @ Wfc + bfc -> GELU -> @ Wproj + bproj, written straight to o_ref.
    h = jnp.dot(x_ref[...], wfc_ref[...],
                preferred_element_type=jnp.float32) + bfc_ref[...]
    g = _gelu_tanh(h)
    o_ref[...] = (jnp.dot(g.astype(wproj_ref.dtype), wproj_ref[...],
                          preferred_element_type=jnp.float32)
                  + bproj_ref[...]).astype(o_ref.dtype)


def mlp_kernel_chunked(x_ref, wfc_ref, bfc_ref, wproj_ref, bproj_ref, o_ref,
                       acc_ref):
    # Hidden dim H is split across grid axis 1 (reduction, "arbitrary").
    # Only used with n_h >= 2.
    j = pl.program_id(1)
    last = pl.num_programs(1) - 1

    h = jnp.dot(x_ref[...], wfc_ref[...],
                preferred_element_type=jnp.float32) + bfc_ref[...]
    g = _gelu_tanh(h)
    part = jnp.dot(g.astype(wproj_ref.dtype), wproj_ref[...],
                   preferred_element_type=jnp.float32)

    @pl.when(j == 0)
    def _():
        acc_ref[...] = part

    @pl.when(jnp.logical_and(j > 0, j < last))
    def _():
        acc_ref[...] += part

    @pl.when(j == last)  # fused finalize: no separate acc round-trip
    def _():
        o_ref[...] = (acc_ref[...] + part + bproj_ref[...]).astype(o_ref.dtype)


def mlp_pallas(x, w_fc, b_fc, w_proj, b_proj, *, tm=1024, th=1024,
               matmul_dtype=None, force_th=None):
    """Fused GPT-2 MLP forward.

    x: (M, C); w_fc: (C, H); b_fc: (H,); w_proj: (H, C); b_proj: (C,)
    (weights stored transposed relative to PyTorch's (out, in) convention).

    matmul_dtype=jnp.bfloat16 is recommended on ALL TPU generations
    (v5e/v6e/v7x MXUs are bf16-native); biases, accumulation and GELU math
    stay in f32 regardless.
    """
    M, C = x.shape
    H = w_fc.shape[1]
    out_dtype = x.dtype

    if matmul_dtype is not None:
        x = x.astype(matmul_dtype)
        w_fc = w_fc.astype(matmul_dtype)
        w_proj = w_proj.astype(matmul_dtype)

    act_b = x.dtype.itemsize
    w_b = w_fc.dtype.itemsize
    out_b = jnp.dtype(out_dtype).itemsize

    # Per-generation VMEM budget (v5e/v6e: 128 MiB, v7x: 64 MiB per core);
    # keep 25% headroom for compiler scratch — never target physical VMEM.
    try:
        vmem_cap = pltpu.get_tpu_info().vmem_capacity_bytes
    except Exception:  # pragma: no cover - conservative fallback
        vmem_cap = 128 << 20
    vmem_budget = int(0.75 * vmem_cap)

    sub = 16 if x.dtype == jnp.bfloat16 else 8

    def rnd(t):
        return max(sub, pl.cdiv(max(t, 1), sub) * sub)

    # Initial M tile: as large as requested, clamped to M (rounded to the
    # sublane multiple of the activation dtype).
    tm_eff = rnd(min(tm, pl.cdiv(M, sub) * sub))
    # Split M into >= 2 tiles when it is big enough: the "parallel" M axis is
    # what shards across the two v7x TensorCores; on v5e/v6e the extra grid
    # step is ~free.
    if pl.cdiv(M, tm_eff) < 2 and M >= 256:
        tm_eff = rnd(pl.cdiv(M, 2))

    def tile_bytes(tm_c, th_c, n_h, w_buffers):
        return (2 * tm_c * C * act_b                   # x tile (double-buf)
                + 2 * tm_c * C * out_b                 # out tile (double-buf)
                + w_buffers * th_c * C * 2 * w_b       # w_fc + w_proj buffers
                + 2 * (th_c + C) * 4                   # f32 bias buffers
                + (tm_c * C * 4 if n_h > 1 else 0)     # f32 accumulator
                + 2 * tm_c * th_c * 4)                 # f32 h/g temporaries

    th_eff = None
    if force_th is not None:
        assert force_th == H or (H % force_th == 0 and force_th % 128 == 0), \
            "force_th must be H or a 128-multiple divisor of H"
        th_eff = force_th
    else:
        # Preferred regime: weights fully VMEM-resident (th_eff = H). Shrink
        # tm before giving up on residency — one weight pass per call beats
        # any chunked tiling.
        if H <= 128 or H % 128 == 0:
            t = tm_eff
            while True:
                if tile_bytes(t, H, 1, 2) <= vmem_budget:
                    th_eff, tm_eff = H, t
                    break
                t_next = rnd(t // 2)
                if t_next >= t:
                    break
                t = t_next
        if th_eff is None:
            # Chunked fallback (e.g. f32 weights at GPT-2 size on v7x): keep
            # tm as large as possible, pick the largest 128-multiple divisor
            # of H that fits with 3-deep weight prefetch buffers.
            t = tm_eff
            while th_eff is None:
                cand = (min(th, H) // 128) * 128
                while cand >= 128:
                    if (H % cand == 0
                            and tile_bytes(t, cand, H // cand, 3) <= vmem_budget):
                        th_eff, tm_eff = cand, t
                        break
                    cand -= 128
                if th_eff is None:
                    t_next = rnd(t // 2)
                    if t_next >= t:
                        break
                    t = t_next
        if th_eff is None:
            # Degenerate fallback (H not a 128 multiple / nothing fits).
            th_eff = 128 if (H > 128 and H % 128 == 0) else H

    use_resident = th_eff == H
    n_m = pl.cdiv(M, tm_eff)
    n_h = 1 if use_resident else H // th_eff

    b_fc2 = b_fc.reshape(1, H).astype(jnp.float32)
    b_proj2 = b_proj.reshape(1, C).astype(jnp.float32)

    need = tile_bytes(tm_eff, th_eff, n_h, 2 if use_resident else 3)
    vmem_limit = int(min(vmem_budget, max(need + (8 << 20), 32 << 20)))

    # Cost estimate consistent with the chosen tiling (resident weights are
    # read once for the whole call; chunked weights once per M tile).
    weight_bytes = C * H * w_b + H * C * w_b + H * 4 + C * 4
    cost = pl.CostEstimate(
        flops=4 * M * C * H,
        transcendentals=M * H,
        bytes_accessed=(M * C * act_b + M * C * out_b
                        + (1 if use_resident else n_m) * weight_bytes))

    if use_resident:
        grid_spec = pltpu.PrefetchScalarGridSpec(
            num_scalar_prefetch=0,
            grid=(n_m,),
            in_specs=[
                pl.BlockSpec((tm_eff, C), lambda i: (i, 0)),   # x tile
                pl.BlockSpec((C, H), lambda i: (0, 0)),        # w_fc (resident)
                pl.BlockSpec((1, H), lambda i: (0, 0)),        # b_fc
                pl.BlockSpec((H, C), lambda i: (0, 0)),        # w_proj (resident)
                pl.BlockSpec((1, C), lambda i: (0, 0)),        # b_proj
            ],
            out_specs=pl.BlockSpec((tm_eff, C), lambda i: (i, 0)),
            scratch_shapes=[],
        )
        kernel = mlp_kernel_resident
        dims = ("parallel",)
    else:
        def wspec(shape, index_map):
            # 3-deep weight prefetch hides DMA in the chunked regime; fall
            # back to the default double buffer if pipeline_mode is absent.
            try:
                return pl.BlockSpec(shape, index_map,
                                    pipeline_mode=pl.Buffered(3))
            except TypeError:
                return pl.BlockSpec(shape, index_map)

        grid_spec = pltpu.PrefetchScalarGridSpec(
            num_scalar_prefetch=0,
            grid=(n_m, n_h),
            in_specs=[
                pl.BlockSpec((tm_eff, C), lambda i, j: (i, 0)),   # x tile
                wspec((C, th_eff), lambda i, j: (0, j)),          # w_fc chunk
                pl.BlockSpec((1, th_eff), lambda i, j: (0, j)),   # b_fc chunk
                wspec((th_eff, C), lambda i, j: (j, 0)),          # w_proj chunk
                pl.BlockSpec((1, C), lambda i, j: (0, 0)),        # b_proj
            ],
            out_specs=pl.BlockSpec((tm_eff, C), lambda i, j: (i, 0)),
            scratch_shapes=[pltpu.VMEM((tm_eff, C), jnp.float32)],
        )
        kernel = mlp_kernel_chunked
        dims = ("parallel", "arbitrary")

    return pl.pallas_call(
        kernel,
        out_shape=jax.ShapeDtypeStruct((M, C), out_dtype),
        grid_spec=grid_spec,
        compiler_params=pltpu.CompilerParams(
            dimension_semantics=dims,
            vmem_limit_bytes=vmem_limit),
        cost_estimate=cost,
    )(x, w_fc, b_fc2, w_proj, b_proj2)


def mlp_ref(x, w_fc, b_fc, w_proj, b_proj):
    h = x @ w_fc + b_fc
    c = 0.7978845608028654
    g = 0.5 * h * (1.0 + jnp.tanh(c * (h + 0.044715 * h ** 3)))
    return g @ w_proj + b_proj


if __name__ == "__main__":
    # Small, MLP-consistent shapes: batch=2, seq=8, n_embd=32 -> hidden=128.
    B, T, C = 2, 8, 32
    H = 4 * C

    key = jax.random.PRNGKey(0)
    kx, kw1, kb1, kw2, kb2, kx2, kw3, kb3, kw4, kb4 = jax.random.split(key, 10)

    x = jax.random.normal(kx, (B, T, C), dtype=jnp.float32)
    # Deterministic param init (shapes from nn.Linear(C,4C) / nn.Linear(4C,C)),
    # stored transposed relative to PyTorch's (out, in) convention.
    w_fc = jax.random.normal(kw1, (C, H), dtype=jnp.float32) * 0.02
    b_fc = jax.random.normal(kb1, (H,), dtype=jnp.float32) * 0.02
    w_proj = jax.random.normal(kw2, (H, C), dtype=jnp.float32) * 0.02
    b_proj = jax.random.normal(kb2, (C,), dtype=jnp.float32) * 0.02

    x2d = x.reshape(B * T, C)
    ref = mlp_ref(x2d, w_fc, b_fc, w_proj, b_proj)

    # 1) f32, weights fully VMEM-resident (default path).
    out = jax.block_until_ready(mlp_pallas(x2d, w_fc, b_fc, w_proj, b_proj))
    assert out.shape == (B * T, C)
    assert jnp.allclose(out, ref, atol=1e-5, rtol=1e-5), "f32 mismatch"

    # 2) Ragged M — no wrapper-side padding; Pallas masks the partial M tile.
    m_odd = 12
    out_odd = jax.block_until_ready(
        mlp_pallas(x2d[:m_odd], w_fc, b_fc, w_proj, b_proj))
    assert jnp.allclose(out_odd, ref[:m_odd], atol=1e-5, rtol=1e-5), \
        "ragged-M mismatch"

    # 3) bf16 matmul operands (recommended on v5e/v6e/v7x), f32 accum/GELU.
    out_bf16 = jax.block_until_ready(
        mlp_pallas(x2d, w_fc, b_fc, w_proj, b_proj, matmul_dtype=jnp.bfloat16))
    assert jnp.allclose(out_bf16, ref, atol=3e-2, rtol=1e-1), "bf16 mismatch"

    # 4) Hidden-dim-chunked fallback (used when weights exceed the VMEM
    #    budget, e.g. f32 GPT-2 weights on v7x) — forced here at a small size.
    C2 = 64
    H2 = 4 * C2
    x2 = jax.random.normal(kx2, (B * T, C2), dtype=jnp.float32)
    w_fc_b = jax.random.normal(kw3, (C2, H2), dtype=jnp.float32) * 0.02
    b_fc_b = jax.random.normal(kb3, (H2,), dtype=jnp.float32) * 0.02
    w_proj_b = jax.random.normal(kw4, (H2, C2), dtype=jnp.float32) * 0.02
    b_proj_b = jax.random.normal(kb4, (C2,), dtype=jnp.float32) * 0.02
    ref2 = mlp_ref(x2, w_fc_b, b_fc_b, w_proj_b, b_proj_b)
    out2 = jax.block_until_ready(
        mlp_pallas(x2, w_fc_b, b_fc_b, w_proj_b, b_proj_b, force_th=128))
    assert jnp.allclose(out2, ref2, atol=1e-5, rtol=1e-5), "chunked mismatch"

    print("KERNEL_OK")
</pallas_src>

<mosaic_0001>
module attributes {stable_mosaic.version = 11 : i64} {
  func.func @mlp_kernel_resident(%arg0: i32, %arg1: memref<16x32xf32, #tpu.memory_space<vmem>>, %arg2: memref<32x128xf32, #tpu.memory_space<vmem>>, %arg3: memref<1x128xf32, #tpu.memory_space<vmem>>, %arg4: memref<128x32xf32, #tpu.memory_space<vmem>>, %arg5: memref<1x32xf32, #tpu.memory_space<vmem>>, %arg6: memref<16x32xf32, #tpu.memory_space<vmem>>) attributes {dimension_semantics = [#tpu.dimension_semantics<parallel>], iteration_bounds = array<i64: 1>, scalar_prefetch = 0 : i64, scratch_operands = 0 : i64, tpu.core_type = #tpu.core_type<tc>, window_params = [{transform_indices = @transform_0, window_bounds = array<i64: 16, 32>}, {pipeline_mode = #tpu.pipeline_mode<synchronous>, transform_indices = @transform_1, window_bounds = array<i64: 32, 128>}, {pipeline_mode = #tpu.pipeline_mode<synchronous>, transform_indices = @transform_2, window_bounds = array<i64: 1, 128>}, {pipeline_mode = #tpu.pipeline_mode<synchronous>, transform_indices = @transform_3, window_bounds = array<i64: 128, 32>}, {pipeline_mode = #tpu.pipeline_mode<synchronous>, transform_indices = @transform_4, window_bounds = array<i64: 1, 32>}, {transform_indices = @transform_5, window_bounds = array<i64: 16, 32>}]} {
    %c0 = arith.constant 0 : index
    %c0_0 = arith.constant 0 : index
    %0 = vector.load %arg1[%c0, %c0_0] : memref<16x32xf32, #tpu.memory_space<vmem>>, vector<16x32xf32>
    %c0_1 = arith.constant 0 : index
    %c0_2 = arith.constant 0 : index
    %1 = vector.load %arg2[%c0_1, %c0_2] : memref<32x128xf32, #tpu.memory_space<vmem>>, vector<32x128xf32>
    %cst = arith.constant dense<0.000000e+00> : vector<16x128xf32>
    %2 = tpu.matmul %0, %1, %cst {dimension_numbers = #tpu.dot_dimension_numbers<[1], [0], [0], [1], [0, 0, 1, 1], [], []>} : vector<16x32xf32>, vector<32x128xf32>, vector<16x128xf32> -> vector<16x128xf32>
    %c0_3 = arith.constant 0 : index
    %c0_4 = arith.constant 0 : index
    %3 = vector.load %arg3[%c0_3, %c0_4] : memref<1x128xf32, #tpu.memory_space<vmem>>, vector<1x128xf32>
    %4 = vector.broadcast %3 : vector<1x128xf32> to vector<16x128xf32>
    %5 = arith.addf %2, %4 : vector<16x128xf32>
    %6 = arith.mulf %5, %5 : vector<16x128xf32>
    %cst_5 = arith.constant 5.000000e-01 : f32
    %7 = vector.broadcast %cst_5 : f32 to vector<16x128xf32>
    %8 = arith.mulf %7, %5 : vector<16x128xf32>
    %cst_6 = arith.constant 0.797884583 : f32
    %9 = vector.broadcast %cst_6 : f32 to vector<16x128xf32>
    %10 = arith.mulf %9, %5 : vector<16x128xf32>
    %cst_7 = arith.constant 4.471500e-02 : f32
    %11 = vector.broadcast %cst_7 : f32 to vector<16x128xf32>
    %12 = arith.mulf %11, %6 : vector<16x128xf32>
    %cst_8 = arith.constant 1.000000e+00 : f32
    %13 = vector.broadcast %cst_8 : f32 to vector<16x128xf32>
    %14 = arith.addf %13, %12 : vector<16x128xf32>
    %15 = arith.mulf %10, %14 : vector<16x128xf32>
    %16 = math.tanh %15 : vector<16x128xf32>
    %cst_9 = arith.constant 1.000000e+00 : f32
    %17 = vector.broadcast %cst_9 : f32 to vector<16x128xf32>
    %18 = arith.addf %17, %16 : vector<16x128xf32>
    %19 = arith.mulf %8, %18 : vector<16x128xf32>
    %c0_10 = arith.constant 0 : index
    %c0_11 = arith.constant 0 : index
    %20 = vector.load %arg4[%c0_10, %c0_11] : memref<128x32xf32, #tpu.memory_space<vmem>>, vector<128x32xf32>
    %cst_12 = arith.constant dense<0.000000e+00> : vector<16x32xf32>
    %21 = tpu.matmul %19, %20, %cst_12 {dimension_numbers = #tpu.dot_dimension_numbers<[1], [0], [0], [1], [0, 0, 1, 1], [], []>} : vector<16x128xf32>, vector<128x32xf32>, vector<16x32xf32> -> vector<16x32xf32>
    %c0_13 = arith.constant 0 : index
    %c0_14 = arith.constant 0 : index
    %22 = vector.load %arg5[%c0_13, %c0_14] : memref<1x32xf32, #tpu.memory_space<vmem>>, vector<1x32xf32>
    %23 = vector.broadcast %22 : vector<1x32xf32> to vector<16x32xf32>
    %24 = arith.addf %21, %23 : vector<16x32xf32>
    %c0_15 = arith.constant 0 : index
    %c0_16 = arith.constant 0 : index
    %25 = vector.load %arg6[%c0_15, %c0_16] : memref<16x32xf32, #tpu.memory_space<vmem>>, vector<16x32xf32>
    tpu.vector_store %arg6[%c0_15, %c0_16], %24 {strides = array<i32>} : memref<16x32xf32, #tpu.memory_space<vmem>>, vector<16x32xf32>,
    return
  }
  func.func @transform_0(%arg0: i32) -> (i32, i32) {
    %c0_i32 = arith.constant 0 : i32
    %c0_i32_0 = arith.constant 0 : i32
    return %arg0, %c0_i32 : i32, i32
  }
  func.func @transform_1(%arg0: i32) -> (i32, i32) {
    %c0_i32 = arith.constant 0 : i32
    %c0_i32_0 = arith.constant 0 : i32
    %c0_i32_1 = arith.constant 0 : i32
    return %c0_i32, %c0_i32_0 : i32, i32
  }
  func.func @transform_2(%arg0: i32) -> (i32, i32) {
    %c0_i32 = arith.constant 0 : i32
    %c0_i32_0 = arith.constant 0 : i32
    %c0_i32_1 = arith.constant 0 : i32
    return %c0_i32, %c0_i32_0 : i32, i32
  }
  func.func @transform_3(%arg0: i32) -> (i32, i32) {
    %c0_i32 = arith.constant 0 : i32
    %c0_i32_0 = arith.constant 0 : i32
    %c0_i32_1 = arith.constant 0 : i32
    return %c0_i32, %c0_i32_0 : i32, i32
  }
  func.func @transform_4(%arg0: i32) -> (i32, i32) {
    %c0_i32 = arith.constant 0 : i32
    %c0_i32_0 = arith.constant 0 : i32
    %c0_i32_1 = arith.constant 0 : i32
    return %c0_i32, %c0_i32_0 : i32, i32
  }
  func.func @transform_5(%arg0: i32) -> (i32, i32) {
    %c0_i32 = arith.constant 0 : i32
    %c0_i32_0 = arith.constant 0 : i32
    return %arg0, %c0_i32 : i32, i32
  }
}

</mosaic_0001>

<llo_original>
// kernel: tpu_custom_call.1
$region0: #{tpu_custom_call.1}
  #allocation0 [shape = 'u32[]', space=smem, size = 0x4, offset = 0x4, fixed_abs, tag = 'smem constant byte address 0x4 - core index']
  #allocation1 [shape = 'u32[144,128]{1,0:T(1,128)}', space=vmem, size = 0x12000, scoped, tag = 'internal scratch']
  %s0 = inlined_call_operand.vmem [shape: f32[16,32], index: 0, kind: input, shape index: {}]
  %s1 = inlined_call_operand.vmem [shape: f32[32,128], index: 1, kind: input, shape index: {}]
  %s2 = inlined_call_operand.vmem [shape: f32[1,128], index: 2, kind: input, shape index: {}]
  %s3 = inlined_call_operand.vmem [shape: f32[128,32], index: 3, kind: input, shape index: {}]
  %s4 = inlined_call_operand.vmem [shape: f32[1,32], index: 4, kind: input, shape index: {}]
  %s5 = inlined_call_operand.hbm [shape: f32[16,32], index: 5, kind: output, shape index: {}]
  %s6 = sld [smem:[#allocation0]]
  $region30: #{tpu_custom_call.1} parent=0
    _
  %s8 = ssub.s32 1, %s6
  %s9 = scalar_select 0, %s8, %s6
  $region1: #{tpu_custom_call.1} parent=0
    #allocation2 [shape = 'u8[8192]{0}', space=vmem, size = 0x2000, scoped, tag = 'output window, operand 0, single buffered']
    #allocation3 [shape = 's32[1]{0}', space=sflag, size = 0x4, scoped, tag = 'scoped memory for tpu_custom_call.1']
    %10 = vsyncpa [#allocation3], 0
    // Predicated region
    $region2: #{tpu_custom_call.1} parent=1 // pred_check
      _
    $region3: #{tpu_custom_call.1} parent=1 // pred_check_branch
      %12 = sbr.rel (0) target = $region5
    $region4: #{tpu_custom_call.1} parent=1 // pred_region
      _
    $region5: #{tpu_custom_call.1} parent=1 // pred_fallthru
      _
    // Predicated region
    $region6: #{tpu_custom_call.1} parent=1 // pred_check
      _
    $region7: #{tpu_custom_call.1} parent=1 // pred_check_branch
      %14 = sbr.rel (0) target = $region9
    $region8: #{tpu_custom_call.1} parent=1 // pred_region
      _
    $region9: #{tpu_custom_call.1} parent=1 // pred_fallthru
      _
    // Predicated region
    $region10: #{tpu_custom_call.1} parent=1 // pred_check
      _
    $region11: #{tpu_custom_call.1} parent=1 // pred_check_branch
      %16 = sbr.rel (0) target = $region13
    $region12: #{tpu_custom_call.1} parent=1 // pred_region
      _
    $region13: #{tpu_custom_call.1} parent=1 // pred_fallthru
      _
    // Predicated region
    $region14: #{tpu_custom_call.1} parent=1 // pred_check
      _
    $region15: #{tpu_custom_call.1} parent=1 // pred_check_branch
      %18 = sbr.rel (0) target = $region17
    $region16: #{tpu_custom_call.1} parent=1 // pred_region
      _
    $region17: #{tpu_custom_call.1} parent=1 // pred_fallthru
      _
    // Predicated region
    $region18: #{tpu_custom_call.1} parent=1 // pred_check
      _
    $region19: #{tpu_custom_call.1} parent=1 // pred_check_branch
      %20 = sbr.rel (0) target = $region21
    $region20: #{tpu_custom_call.1} parent=1 // pred_region
      _
    $region21: #{tpu_custom_call.1} parent=1 // pred_fallthru
      _
    %v21 = vld [vmem:[%s0] sm:$0xff]
    %v22 = vld [vmem:[%s0 + $0x8] sm:$0xff]
    %v23 = vld [vmem:[%s1] sm:$0xff]
    %v24 = vld [vmem:[%s1 + $0x8] sm:$0xff]
    %v25 = vld [vmem:[%s1 + $0x10] sm:$0xff]
    %v26 = vld [vmem:[%s1 + $0x18] sm:$0xff]
    %v27 = vld [vmem:[%s2] sm:$0x1]
    %v29 = vlaneseq
    %v30 = vshrl.u32 %v29, 7
    %v31 = vsub.s32 0, %v30
    %v32 = vrot.slane %v27, %v31
    %vm34 = vcmask 261120
    %v36 = vsel %vm34, %v21, 0
    %v39 = vsel %vm34, %v22, 0
    %41 = vmatprep.subr.mxu0 0.0
    %42 = vmatpush1.msra.mxu0 0.0
    %43 = vmatprep.subr.mxu0 0.0
    %44 = vmatpush1.msra.mxu0 0.0
    %45 = vmatprep.subr.mxu0 0.0
    %46 = vmatpush1.msra.mxu0 0.0
    %47 = vmatprep.subr.mxu0 0.0
    %48 = vmatpush1.msra.mxu0 0.0
    %49 = vmatprep.subr.mxu0 0.0
    %50 = vmatpush1.msra.mxu0 0.0
    %51 = vmatprep.subr.mxu0 0.0
    %52 = vmatpush1.msra.mxu0 0.0
    %53 = vmatprep.subr.mxu0 0.0
    %54 = vmatpush1.msra.mxu0 0.0
    %55 = vmatprep.subr.mxu0 0.0
    %56 = vmatpush1.msra.mxu0 0.0
    %57 = vmatprep.subr.mxu0 0.0
    %58 = vmatpush1.msra.mxu0 0.0
    %59 = vmatprep.subr.mxu0 0.0
    %60 = vmatpush1.msra.mxu0 0.0
    %61 = vmatprep.subr.mxu0 0.0
    %62 = vmatpush1.msra.mxu0 0.0
    %63 = vmatprep.subr.mxu0 0.0
    %64 = vmatpush1.msra.mxu0 0.0
    %65 = vmatprep.subr.mxu0 0.0
    %66 = vmatpush1.msra.mxu0 %v26
    %67 = vmatprep.subr.mxu0 0.0
    %68 = vmatpush1.msra.mxu0 %v25
    %69 = vmatprep.subr.mxu0 0.0
    %70 = vmatpush1.msra.mxu0 %v24
    %71 = vmatprep.subr.mxu0 0.0
    %72 = vmatpush1.msra.mxu0 %v23
    %73 = vmatprep.subr.mxu0 0.0
    %74 = vmatpush2.msra.mxu0 0.0
    %75 = vmatprep.subr.mxu0 0.0
    %76 = vmatpush2.msra.mxu0 0.0
    %77 = vmatprep.subr.mxu0 0.0
    %78 = vmatpush2.msra.mxu0 0.0
    %79 = vmatprep.subr.mxu0 0.0
    %80 = vmatpush2.msra.mxu0 0.0
    %81 = vmatprep.subr.mxu0 0.0
    %82 = vmatpush2.msra.mxu0 0.0
    %83 = vmatprep.subr.mxu0 0.0
    %84 = vmatpush2.msra.mxu0 0.0
    %85 = vmatprep.subr.mxu0 0.0
    %86 = vmatpush2.msra.mxu0 0.0
    %87 = vmatprep.subr.mxu0 0.0
    %88 = vmatpush2.msra.mxu0 0.0
    %89 = vmatprep.subr.mxu0 0.0
    %90 = vmatpush2.msra.mxu0 0.0
    %91 = vmatprep.subr.mxu0 0.0
    %92 = vmatpush2.msra.mxu0 0.0
    %93 = vmatprep.subr.mxu0 0.0
    %94 = vmatpush2.msra.mxu0 0.0
    %95 = vmatprep.subr.mxu0 0.0
    %96 = vmatpush2.msra.mxu0 0.0
    %97 = vmatprep.subr.mxu0 0.0
    %98 = vmatpush2.msra.mxu0 0.0
    %99 = vmatprep.subr.mxu0 0.0
    %100 = vmatpush2.msra.mxu0 0.0
    %101 = vmatprep.subr.mxu0 0.0
    %102 = vmatpush2.msra.mxu0 0.0
    %103 = vmatprep.subr.mxu0 0.0
    %104 = vmatpush2.msra.mxu0 0.0
    %105 = vmatprep.mubr.f32.mxu0 0.0
    %106 = vmatmul.mubr.f32.gmra.mxu0 %v36
    %v107 = vpop.f32.mrf.mxu0
    %v108 = vadd.f32 %v32, %v107
    %v109 = vpop.f32.mrf.mxu0
    %110 = vmatprep.mubr.f32.mxu0 0.0
    %111 = vmatmul.mubr.f32.gmra.mxu0 %v39
    %v112 = vpop.f32.mrf.mxu0
    %v113 = vadd.f32 %v32, %v112
    %v114 = vpop.f32.mrf.mxu0
    %115 = vdwg.mxu0
    %v116 = vmul.f32 %v108, %v108
    %v117 = vmul.f32 %v113, %v113
    %v118 = vmul.f32 %v108, 0.5
    %v119 = vmul.f32 %v113, 0.5
    %v120 = vmul.f32 %v108, 0.7978846
    %v121 = vmul.f32 %v113, 0.7978846
    %v122 = vmul.f32 %v116, 0.044715
    %v123 = vmul.f32 %v117, 0.044715
    %v124 = vadd.f32 %v122, 1.0
    %v125 = vadd.f32 %v123, 1.0
    %v126 = vmul.f32 %v120, %v124
    %v127 = vmul.f32 %v121, %v125
    %v128 = vtanh.pop %v126
    %v129 = vtanh.pop %v127
    %v130 = vadd.f32 %v128, 1.0
    %v131 = vadd.f32 %v129, 1.0
    %v132 = vmul.f32 %v118, %v130
    %v133 = vmul.f32 %v119, %v131
    %v134 = vld [vmem:[%s3] sm:$0xff]
    %v135 = vld [vmem:[%s3 + $0x8] sm:$0xff]
    %v136 = vld [vmem:[%s3 + $0x10] sm:$0xff]
    %v137 = vld [vmem:[%s3 + $0x18] sm:$0xff]
    %v138 = vld [vmem:[%s3 + $0x20] sm:$0xff]
    %v139 = vld [vmem:[%s3 + $0x28] sm:$0xff]
    %v140 = vld [vmem:[%s3 + $0x30] sm:$0xff]
    %v141 = vld [vmem:[%s3 + $0x38] sm:$0xff]
    %v142 = vld [vmem:[%s3 + $0x40] sm:$0xff]
    %v143 = vld [vmem:[%s3 + $0x48] sm:$0xff]
    %v144 = vld [vmem:[%s3 + $0x50] sm:$0xff]
    %v145 = vld [vmem:[%s3 + $0x58] sm:$0xff]
    %v146 = vld [vmem:[%s3 + $0x60] sm:$0xff]
    %v147 = vld [vmem:[%s3 + $0x68] sm:$0xff]
    %v148 = vld [vmem:[%s3 + $0x70] sm:$0xff]
    %v149 = vld [vmem:[%s3 + $0x78] sm:$0xff]
    %v150 = vld [vmem:[%s4] sm:$0x1]
    %v152 = vlaneseq
    %v153 = vshrl.u32 %v152, 7
    %v154 = vsub.s32 0, %v153
    %v155 = vrot.slane %v150, %v154
    %157 = vmatprep.subr.mxu0 0.0
    %158 = vmatpush1.msra.mxu0 %v149
    %159 = vmatprep.subr.mxu0 0.0
    %160 = vmatpush1.msra.mxu0 %v148
    %161 = vmatprep.subr.mxu0 0.0
    %162 = vmatpush1.msra.mxu0 %v147
    %163 = vmatprep.subr.mxu0 0.0
    %164 = vmatpush1.msra.mxu0 %v146
    %165 = vmatprep.subr.mxu0 0.0
    %166 = vmatpush1.msra.mxu0 %v145
    %167 = vmatprep.subr.mxu0 0.0
    %168 = vmatpush1.msra.mxu0 %v144
    %169 = vmatprep.subr.mxu0 0.0
    %170 = vmatpush1.msra.mxu0 %v143
    %171 = vmatprep.subr.mxu0 0.0
    %172 = vmatpush1.msra.mxu0 %v142
    %173 = vmatprep.subr.mxu0 0.0
    %174 = vmatpush1.msra.mxu0 %v141
    %175 = vmatprep.subr.mxu0 0.0
    %176 = vmatpush1.msra.mxu0 %v140
    %177 = vmatprep.subr.mxu0 0.0
    %178 = vmatpush1.msra.mxu0 %v139
    %179 = vmatprep.subr.mxu0 0.0
    %180 = vmatpush1.msra.mxu0 %v138
    %181 = vmatprep.subr.mxu0 0.0
    %182 = vmatpush1.msra.mxu0 %v137
    %183 = vmatprep.subr.mxu0 0.0
    %184 = vmatpush1.msra.mxu0 %v136
    %185 = vmatprep.subr.mxu0 0.0
    %186 = vmatpush1.msra.mxu0 %v135
    %187 = vmatprep.subr.mxu0 0.0
    %188 = vmatpush1.msra.mxu0 %v134
    %189 = vmatprep.subr.mxu0 0.0
    %190 = vmatpush2.msra.mxu0 0.0
    %191 = vmatprep.subr.mxu0 0.0
    %192 = vmatpush2.msra.mxu0 0.0
    %193 = vmatprep.subr.mxu0 0.0
    %194 = vmatpush2.msra.mxu0 0.0
    %195 = vmatprep.subr.mxu0 0.0
    %196 = vmatpush2.msra.mxu0 0.0
    %197 = vmatprep.subr.mxu0 0.0
    %198 = vmatpush2.msra.mxu0 0.0
    %199 = vmatprep.subr.mxu0 0.0
    %200 = vmatpush2.msra.mxu0 0.0
    %201 = vmatprep.subr.mxu0 0.0
    %202 = vmatpush2.msra.mxu0 0.0
    %203 = vmatprep.subr.mxu0 0.0
    %204 = vmatpush2.msra.mxu0 0.0
    %205 = vmatprep.subr.mxu0 0.0
    %206 = vmatpush2.msra.mxu0 0.0
    %207 = vmatprep.subr.mxu0 0.0
    %208 = vmatpush2.msra.mxu0 0.0
    %209 = vmatprep.subr.mxu0 0.0
    %210 = vmatpush2.msra.mxu0 0.0
    %211 = vmatprep.subr.mxu0 0.0
    %212 = vmatpush2.msra.mxu0 0.0
    %213 = vmatprep.subr.mxu0 0.0
    %214 = vmatpush2.msra.mxu0 0.0
    %215 = vmatprep.subr.mxu0 0.0
    %216 = vmatpush2.msra.mxu0 0.0
    %217 = vmatprep.subr.mxu0 0.0
    %218 = vmatpush2.msra.mxu0 0.0
    %219 = vmatprep.subr.mxu0 0.0
    %220 = vmatpush2.msra.mxu0 0.0
    %221 = vmatprep.mubr.f32.mxu0 0.0
    %222 = vmatmul.mubr.f32.gmra.mxu0 %v132
    %v223 = vpop.f32.mrf.mxu0
    %v224 = vadd.f32 %v155, %v223
    %v225 = vpop.f32.mrf.mxu0
    %226 = vmatprep.mubr.f32.mxu0 0.0
    %227 = vmatmul.mubr.f32.gmra.mxu0 %v133
    %v228 = vpop.f32.mrf.mxu0
    %v229 = vadd.f32 %v155, %v228
    %v230 = vpop.f32.mrf.mxu0
    %231 = vdwg.mxu0
    %232 = vst.msk [vmem:[#allocation2] sm:$0xff] %vm34, %v224
    %233 = vst.msk [vmem:[#allocation2 + $0x8] sm:$0xff] %vm34, %v229
    // Predicated region
    $region22: #{tpu_custom_call.1} parent=1 // pred_check
      _
    $region23: #{tpu_custom_call.1} parent=1 // pred_check_branch
      %235 = sbr.rel (0) target = $region25
    $region24: #{tpu_custom_call.1} parent=1 // pred_region
      %s237 = ssub.s32 256, 256
      %238 = vsyncadd [#allocation3], %s237
      %s239 = sshll.u32 [#allocation2], 4
      %s240 = int_to_ptr.vmem [resolvable:$true] %s239
      %245 = dma.vmem_to_hbm [thread:$0]  %s240, 256, %s5, [#allocation3], 128, 128, 8
    $region25: #{tpu_custom_call.1} parent=1 // pred_fallthru
      _
    // Predicated region
    $region26: #{tpu_custom_call.1} parent=1 // pred_check
      _
    $region27: #{tpu_custom_call.1} parent=1 // pred_check_branch
      %247 = sbr.rel (0) target = $region29
    $region28: #{tpu_custom_call.1} parent=1 // pred_region
      %248 = dma.done [#allocation3], 256
    $region29: #{tpu_custom_call.1} parent=1 // pred_fallthru
      _
    %249 = vsyncpa [#allocation3], 1

</llo_original>
